<compile_context>
chip_gen: v5e
topology: v5e:2x2
jax: 0.10.0
libtpu: 0.0.40
codegen_flags: <defaults>
</compile_context>

<pallas_src>
import functools

import jax
import jax.numpy as jnp
from jax.experimental import pallas as pl
from jax.experimental.pallas import tpu as pltpu

_LANE = 128          # last-dim tiles padded to multiples of 128 lanes
_SUBLANE_BF16 = 16   # a bf16 vreg packs [16, 128]: 16-row alignment -> full vregs
_MAX_TILE_B = 2048   # upper bound on batch-tile rows (amortizes grid-step overhead)


def _round_up(x, m):
    return ((x + m - 1) // m) * m


# ----------------------------------------------------------------------------
# One-time capability / hardware queries (cached; NOT on the per-call path).
# ----------------------------------------------------------------------------

@functools.lru_cache(maxsize=1)
def _buffered_const_supported():
    """True if BlockSpec accepts pipeline_mode=pl.Buffered(1) on this JAX."""
    try:
        pl.BlockSpec((8, _LANE), lambda i: (0, 0), pipeline_mode=pl.Buffered(1))
        return True
    except Exception:
        return False


@functools.lru_cache(maxsize=1)
def _tpu_config():
    """Returns (tensorcores_per_chip, per-core VMEM capacity bytes).

    Conservative defaults (1 TC, 64 MiB — the v7x per-TC size) if the query
    fails, so sizing decisions are always safe on the smallest-VMEM chip."""
    num_tc = 1
    try:
        kind = jax.devices()[0].device_kind.lower()
        # v4 / v5p are megacore (2 TCs); v7x has 2 TCs per chip.
        if ("v4" in kind) or ("v5p" in kind) or ("7" in kind):
            num_tc = 2
    except Exception:
        pass
    vmem_cap = 64 << 20
    try:
        info = pltpu.get_tpu_info()
        for attr in ("vmem_capacity_bytes", "vmem_bytes", "vmem_size_bytes"):
            cap = getattr(info, attr, None)
            if cap:
                vmem_cap = int(cap)
                break
    except Exception:
        pass
    return num_tc, vmem_cap


# ----------------------------------------------------------------------------
# Kernel
# ----------------------------------------------------------------------------

def mlp_kernel(x_ref, w1_ref, b1_ref, w2_ref, b2_ref, w3_ref, b3_ref,
               wc_ref, bc_ref, o_ref):
    """Fused forward: 4 bf16 MXU matmuls (f32 accumulate) + 3 ReLUs on the VPU.

    x arrives f32 and is cast to bf16 in-kernel (avoids an HBM pad/cast round
    trip in the wrapper).  Bias add + ReLU run on the f32 accumulator, then the
    activation is downcast to bf16 for the next matmul.  Biases are (1, N)
    rows; each broadcast is issued exactly once per layer."""
    x = x_ref[...].astype(jnp.bfloat16)

    h = jnp.dot(x, w1_ref[...], preferred_element_type=jnp.float32)
    h = jnp.maximum(h + b1_ref[...], 0.0).astype(jnp.bfloat16)

    h = jnp.dot(h, w2_ref[...], preferred_element_type=jnp.float32)
    h = jnp.maximum(h + b2_ref[...], 0.0).astype(jnp.bfloat16)

    h = jnp.dot(h, w3_ref[...], preferred_element_type=jnp.float32)
    h = jnp.maximum(h + b3_ref[...], 0.0).astype(jnp.bfloat16)

    out = jnp.dot(h, wc_ref[...], preferred_element_type=jnp.float32)
    o_ref[...] = (out + bc_ref[...]).astype(o_ref.dtype)


# ----------------------------------------------------------------------------
# One-time parameter preparation (hoisted off the per-call path).
# ----------------------------------------------------------------------------

def prepare_params(params):
    """Pad weights to 128-lane multiples and cast to bf16, exactly once.

    Layer-1's input dim is kept at the raw F (it is consumed as a full-array
    block dim), so x never needs feature-dim padding.  Biases stay f32 (added
    on the f32 accumulator before ReLU).  Reuse the returned dict across
    forward calls."""
    w1, b1, w2, b2, w3, b3, wc, bc = params
    F, H = w1.shape
    O = wc.shape[1]
    H_pad = _round_up(H, _LANE)
    O_pad = _round_up(O, _LANE)

    def pad_w(w, rows, cols):
        out = jnp.zeros((rows, cols), jnp.bfloat16)
        return out.at[:w.shape[0], :w.shape[1]].set(w.astype(jnp.bfloat16))

    def pad_b(b, cols):
        out = jnp.zeros((1, cols), jnp.float32)
        return out.at[:, :b.shape[-1]].set(b.reshape(1, -1).astype(jnp.float32))

    return dict(
        F=F, H=H, O=O, H_pad=H_pad, O_pad=O_pad,
        w1=pad_w(w1, F, H_pad),      b1=pad_b(b1, H_pad),
        w2=pad_w(w2, H_pad, H_pad),  b2=pad_b(b2, H_pad),
        w3=pad_w(w3, H_pad, H_pad),  b3=pad_b(b3, H_pad),
        wc=pad_w(wc, H_pad, O_pad),  bc=pad_b(bc, O_pad),
    )


# ----------------------------------------------------------------------------
# Forward
# ----------------------------------------------------------------------------

def chatbot_v1_forward(x, prepared, *, tile_b=None):
    """x: [B, input_features] f32 -> logits [B, output_features] f32."""
    F, O = prepared["F"], prepared["O"]
    H_pad, O_pad = prepared["H_pad"], prepared["O_pad"]
    B = x.shape[0]
    assert x.shape[1] == F, "feature dim mismatch with prepared params"

    num_tc, vmem_cap = _tpu_config()
    buffered = _buffered_const_supported()
    const_mult = 1 if buffered else 2   # single- vs double-buffered constants

    # Accurate VMEM footprint accounting.
    const_bytes = const_mult * (
        2 * (F * H_pad + 2 * H_pad * H_pad + H_pad * O_pad)   # bf16 weights
        + 4 * (3 * H_pad + O_pad))                            # f32 biases
    # Per-tile-row bytes: double-buffered f32 x tile, double-buffered f32 out
    # tile, ~2 live f32 temporaries + 1 bf16 activation between matmuls.
    per_row_bytes = 2 * F * 4 + 2 * O_pad * 4 + 2 * H_pad * 4 + H_pad * 2

    headroom = 4 << 20                      # compiler-internal scratch slack
    usable = max(vmem_cap - headroom, 8 << 20)
    max_rows = (usable - const_bytes) // per_row_bytes
    max_rows = max(_SUBLANE_BF16, (max_rows // _SUBLANE_BF16) * _SUBLANE_BF16)
    cap_rows = min(_MAX_TILE_B, int(max_rows))

    b16 = _round_up(max(B, 1), _SUBLANE_BF16)
    if tile_b is None:
        if num_tc >= 2 and b16 >= 2 * 512:
            # Split across TensorCores only when each core still gets a
            # full-sized (>=512-row) tile; otherwise one tile is cheaper.
            tile_b = _round_up(pl.cdiv(b16, num_tc), _SUBLANE_BF16)
        else:
            # Single TC (v5e/v6e) or small batch: the grid is a serial loop,
            # so use the largest tile that fits VMEM.
            tile_b = b16
    tile_b = max(_round_up(int(tile_b), _SUBLANE_BF16), _SUBLANE_BF16)
    tile_b = min(tile_b, cap_rows)

    B_pad = _round_up(b16, tile_b)
    grid = (B_pad // tile_b,)

    # Only the batch dim is padded, and only when it does not already divide.
    xp = x if B_pad == B else jnp.pad(x, ((0, B_pad - B), (0, 0)))

    # Explicit VMEM budget from the real footprint, clamped to the per-core
    # capacity (64 MiB on v7x, 128 MiB on v5e/v6e).
    vmem_limit = const_bytes + tile_b * per_row_bytes + headroom
    vmem_limit = int(min(max(vmem_limit, 16 << 20), vmem_cap))
    # TODO(synk): for very large vocabularies (w1 alone ~> per-TC VMEM on v7x),
    # add a K-grid axis over F with an f32 accumulator for layer 1 instead of
    # keeping all of w1 resident.

    const_kw = {"pipeline_mode": pl.Buffered(1)} if buffered else {}

    def const_spec(shape):
        # Constant across the batch grid -> block index (0, 0); single-buffered
        # when supported so only the x tile and the output double-buffer.
        return pl.BlockSpec(shape, lambda i: (0, 0), **const_kw)

    call = pl.pallas_call(
        mlp_kernel,
        out_shape=jax.ShapeDtypeStruct((B_pad, O_pad), jnp.float32),
        grid=grid,
        in_specs=[
            pl.BlockSpec((tile_b, F), lambda i: (i, 0)),          # x tile (f32)
            const_spec((F, H_pad)),     const_spec((1, H_pad)),   # layer_1
            const_spec((H_pad, H_pad)), const_spec((1, H_pad)),   # layer_2
            const_spec((H_pad, H_pad)), const_spec((1, H_pad)),   # layer_3
            const_spec((H_pad, O_pad)), const_spec((1, O_pad)),   # classifier
        ],
        out_specs=pl.BlockSpec((tile_b, O_pad), lambda i: (i, 0)),
        compiler_params=pltpu.CompilerParams(
            dimension_semantics=("parallel",),
            vmem_limit_bytes=vmem_limit),
    )

    out_padded = call(xp,
                      prepared["w1"], prepared["b1"],
                      prepared["w2"], prepared["b2"],
                      prepared["w3"], prepared["b3"],
                      prepared["wc"], prepared["bc"])
    return out_padded[:B, :O]


# ----------------------------------------------------------------------------
# Init + references
# ----------------------------------------------------------------------------

def init_params(key, input_features, output_features, hidden_units):
    """nn.Linear-style init (uniform +-1/sqrt(fan_in)).

    Weights stored pre-transposed [in, out]; biases [1, out]; all float32."""
    dims = [(input_features, hidden_units),
            (hidden_units, hidden_units),
            (hidden_units, hidden_units),
            (hidden_units, output_features)]
    params = []
    for fan_in, fan_out in dims:
        key, kw, kb = jax.random.split(key, 3)
        bound = 1.0 / jnp.sqrt(fan_in)
        w = jax.random.uniform(kw, (fan_in, fan_out), jnp.float32, -bound, bound)
        b = jax.random.uniform(kb, (1, fan_out), jnp.float32, -bound, bound)
        params.extend([w, b])
    return tuple(params)


def reference_forward_f32(x, params):
    w1, b1, w2, b2, w3, b3, wc, bc = params
    h = jnp.maximum(x @ w1 + b1, 0.0)
    h = jnp.maximum(h @ w2 + b2, 0.0)
    h = jnp.maximum(h @ w3 + b3, 0.0)
    return h @ wc + bc


def reference_forward_mixed(x, params):
    """Same precision recipe as the kernel: bf16 matmul inputs, f32 acc/epilogue."""
    w1, b1, w2, b2, w3, b3, wc, bc = params
    bf = jnp.bfloat16
    h = jnp.dot(x.astype(bf), w1.astype(bf), preferred_element_type=jnp.float32)
    h = jnp.maximum(h + b1, 0.0).astype(bf)
    h = jnp.dot(h, w2.astype(bf), preferred_element_type=jnp.float32)
    h = jnp.maximum(h + b2, 0.0).astype(bf)
    h = jnp.dot(h, w3.astype(bf), preferred_element_type=jnp.float32)
    h = jnp.maximum(h + b3, 0.0).astype(bf)
    out = jnp.dot(h, wc.astype(bf), preferred_element_type=jnp.float32)
    return out + bc


if __name__ == "__main__":
    # Small shapes consistent with the module: input_features = len(allwords)
    # stand-in, output_features = len(tags) stand-in, hidden_units = 256.
    batch = 16
    input_features = 64
    hidden_units = 256
    output_features = 10

    key = jax.random.PRNGKey(0)
    key, kx = jax.random.split(key)
    x = jax.random.normal(kx, (batch, input_features), jnp.float32)
    params = init_params(key, input_features, output_features, hidden_units)

    prepared = prepare_params(params)            # one-time pad + cast
    out = chatbot_v1_forward(x, prepared)
    out = jax.block_until_ready(out)
    assert out.shape == (batch, output_features)

    ref_mixed = reference_forward_mixed(x, params)   # same precision recipe
    ref_f32 = reference_forward_f32(x, params)       # original f32 semantics
    assert jnp.allclose(out, ref_mixed, atol=1e-3, rtol=1e-3), \
        "mismatch vs mixed-precision reference"
    assert jnp.allclose(out, ref_f32, atol=5e-2, rtol=5e-2), \
        "mismatch vs f32 reference"

    print("KERNEL_OK")
</pallas_src>

<mosaic_0001>
module attributes {stable_mosaic.version = 11 : i64} {
  func.func @mlp_kernel(%arg0: i32, %arg1: memref<16x64xf32, #tpu.memory_space<vmem>>, %arg2: memref<64x256xbf16, #tpu.memory_space<vmem>>, %arg3: memref<1x256xf32, #tpu.memory_space<vmem>>, %arg4: memref<256x256xbf16, #tpu.memory_space<vmem>>, %arg5: memref<1x256xf32, #tpu.memory_space<vmem>>, %arg6: memref<256x256xbf16, #tpu.memory_space<vmem>>, %arg7: memref<1x256xf32, #tpu.memory_space<vmem>>, %arg8: memref<256x128xbf16, #tpu.memory_space<vmem>>, %arg9: memref<1x128xf32, #tpu.memory_space<vmem>>, %arg10: memref<16x128xf32, #tpu.memory_space<vmem>>) attributes {dimension_semantics = [#tpu.dimension_semantics<parallel>], iteration_bounds = array<i64: 1>, scalar_prefetch = 0 : i64, scratch_operands = 0 : i64, tpu.core_type = #tpu.core_type<tc>, window_params = [{transform_indices = @transform_0, window_bounds = array<i64: 16, 64>}, {pipeline_mode = #tpu.pipeline_mode<synchronous>, transform_indices = @transform_1, window_bounds = array<i64: 64, 256>}, {pipeline_mode = #tpu.pipeline_mode<synchronous>, transform_indices = @transform_2, window_bounds = array<i64: 1, 256>}, {pipeline_mode = #tpu.pipeline_mode<synchronous>, transform_indices = @transform_3, window_bounds = array<i64: 256, 256>}, {pipeline_mode = #tpu.pipeline_mode<synchronous>, transform_indices = @transform_4, window_bounds = array<i64: 1, 256>}, {pipeline_mode = #tpu.pipeline_mode<synchronous>, transform_indices = @transform_5, window_bounds = array<i64: 256, 256>}, {pipeline_mode = #tpu.pipeline_mode<synchronous>, transform_indices = @transform_6, window_bounds = array<i64: 1, 256>}, {pipeline_mode = #tpu.pipeline_mode<synchronous>, transform_indices = @transform_7, window_bounds = array<i64: 256, 128>}, {pipeline_mode = #tpu.pipeline_mode<synchronous>, transform_indices = @transform_8, window_bounds = array<i64: 1, 128>}, {transform_indices = @transform_9, window_bounds = array<i64: 16, 128>}]} {
    %c0 = arith.constant 0 : index
    %c0_0 = arith.constant 0 : index
    %0 = vector.load %arg1[%c0, %c0_0] : memref<16x64xf32, #tpu.memory_space<vmem>>, vector<16x64xf32>
    %1 = arith.truncf %0 : vector<16x64xf32> to vector<16x64xbf16>
    %c0_1 = arith.constant 0 : index
    %c0_2 = arith.constant 0 : index
    %2 = vector.load %arg2[%c0_1, %c0_2] : memref<64x256xbf16, #tpu.memory_space<vmem>>, vector<64x256xbf16>
    %cst = arith.constant dense<0.000000e+00> : vector<16x256xf32>
    %3 = tpu.matmul %1, %2, %cst {dimension_numbers = #tpu.dot_dimension_numbers<[1], [0], [0], [1], [0, 0, 1, 1], [], []>} : vector<16x64xbf16>, vector<64x256xbf16>, vector<16x256xf32> -> vector<16x256xf32>
    %c0_3 = arith.constant 0 : index
    %c0_4 = arith.constant 0 : index
    %4 = vector.load %arg3[%c0_3, %c0_4] : memref<1x256xf32, #tpu.memory_space<vmem>>, vector<1x256xf32>
    %5 = vector.broadcast %4 : vector<1x256xf32> to vector<16x256xf32>
    %6 = arith.addf %3, %5 : vector<16x256xf32>
    %cst_5 = arith.constant 0.000000e+00 : f32
    %7 = vector.broadcast %cst_5 : f32 to vector<16x256xf32>
    %8 = arith.maximumf %6, %7 : vector<16x256xf32>
    %9 = arith.truncf %8 : vector<16x256xf32> to vector<16x256xbf16>
    %c0_6 = arith.constant 0 : index
    %c0_7 = arith.constant 0 : index
    %10 = vector.load %arg4[%c0_6, %c0_7] : memref<256x256xbf16, #tpu.memory_space<vmem>>, vector<256x256xbf16>
    %cst_8 = arith.constant dense<0.000000e+00> : vector<16x256xf32>
    %11 = tpu.matmul %9, %10, %cst_8 {dimension_numbers = #tpu.dot_dimension_numbers<[1], [0], [0], [1], [0, 0, 1, 1], [], []>} : vector<16x256xbf16>, vector<256x256xbf16>, vector<16x256xf32> -> vector<16x256xf32>
    %c0_9 = arith.constant 0 : index
    %c0_10 = arith.constant 0 : index
    %12 = vector.load %arg5[%c0_9, %c0_10] : memref<1x256xf32, #tpu.memory_space<vmem>>, vector<1x256xf32>
    %13 = vector.broadcast %12 : vector<1x256xf32> to vector<16x256xf32>
    %14 = arith.addf %11, %13 : vector<16x256xf32>
    %cst_11 = arith.constant 0.000000e+00 : f32
    %15 = vector.broadcast %cst_11 : f32 to vector<16x256xf32>
    %16 = arith.maximumf %14, %15 : vector<16x256xf32>
    %17 = arith.truncf %16 : vector<16x256xf32> to vector<16x256xbf16>
    %c0_12 = arith.constant 0 : index
    %c0_13 = arith.constant 0 : index
    %18 = vector.load %arg6[%c0_12, %c0_13] : memref<256x256xbf16, #tpu.memory_space<vmem>>, vector<256x256xbf16>
    %cst_14 = arith.constant dense<0.000000e+00> : vector<16x256xf32>
    %19 = tpu.matmul %17, %18, %cst_14 {dimension_numbers = #tpu.dot_dimension_numbers<[1], [0], [0], [1], [0, 0, 1, 1], [], []>} : vector<16x256xbf16>, vector<256x256xbf16>, vector<16x256xf32> -> vector<16x256xf32>
    %c0_15 = arith.constant 0 : index
    %c0_16 = arith.constant 0 : index
    %20 = vector.load %arg7[%c0_15, %c0_16] : memref<1x256xf32, #tpu.memory_space<vmem>>, vector<1x256xf32>
    %21 = vector.broadcast %20 : vector<1x256xf32> to vector<16x256xf32>
    %22 = arith.addf %19, %21 : vector<16x256xf32>
    %cst_17 = arith.constant 0.000000e+00 : f32
    %23 = vector.broadcast %cst_17 : f32 to vector<16x256xf32>
    %24 = arith.maximumf %22, %23 : vector<16x256xf32>
    %25 = arith.truncf %24 : vector<16x256xf32> to vector<16x256xbf16>
    %c0_18 = arith.constant 0 : index
    %c0_19 = arith.constant 0 : index
    %26 = vector.load %arg8[%c0_18, %c0_19] : memref<256x128xbf16, #tpu.memory_space<vmem>>, vector<256x128xbf16>
    %cst_20 = arith.constant dense<0.000000e+00> : vector<16x128xf32>
    %27 = tpu.matmul %25, %26, %cst_20 {dimension_numbers = #tpu.dot_dimension_numbers<[1], [0], [0], [1], [0, 0, 1, 1], [], []>} : vector<16x256xbf16>, vector<256x128xbf16>, vector<16x128xf32> -> vector<16x128xf32>
    %c0_21 = arith.constant 0 : index
    %c0_22 = arith.constant 0 : index
    %28 = vector.load %arg9[%c0_21, %c0_22] : memref<1x128xf32, #tpu.memory_space<vmem>>, vector<1x128xf32>
    %29 = vector.broadcast %28 : vector<1x128xf32> to vector<16x128xf32>
    %30 = arith.addf %27, %29 : vector<16x128xf32>
    %c0_23 = arith.constant 0 : index
    %c0_24 = arith.constant 0 : index
    %31 = vector.load %arg10[%c0_23, %c0_24] : memref<16x128xf32, #tpu.memory_space<vmem>>, vector<16x128xf32>
    tpu.vector_store %arg10[%c0_23, %c0_24], %30 {strides = array<i32>} : memref<16x128xf32, #tpu.memory_space<vmem>>, vector<16x128xf32>,
    return
  }
  func.func @transform_0(%arg0: i32) -> (i32, i32) {
    %c0_i32 = arith.constant 0 : i32
    %c0_i32_0 = arith.constant 0 : i32
    return %arg0, %c0_i32 : i32, i32
  }
  func.func @transform_1(%arg0: i32) -> (i32, i32) {
    %c0_i32 = arith.constant 0 : i32
    %c0_i32_0 = arith.constant 0 : i32
    %c0_i32_1 = arith.constant 0 : i32
    return %c0_i32, %c0_i32_0 : i32, i32
  }
  func.func @transform_2(%arg0: i32) -> (i32, i32) {
    %c0_i32 = arith.constant 0 : i32
    %c0_i32_0 = arith.constant 0 : i32
    %c0_i32_1 = arith.constant 0 : i32
    return %c0_i32, %c0_i32_0 : i32, i32
  }
  func.func @transform_3(%arg0: i32) -> (i32, i32) {
    %c0_i32 = arith.constant 0 : i32
    %c0_i32_0 = arith.constant 0 : i32
    %c0_i32_1 = arith.constant 0 : i32
    return %c0_i32, %c0_i32_0 : i32, i32
  }
  func.func @transform_4(%arg0: i32) -> (i32, i32) {
    %c0_i32 = arith.constant 0 : i32
    %c0_i32_0 = arith.constant 0 : i32
    %c0_i32_1 = arith.constant 0 : i32
    return %c0_i32, %c0_i32_0 : i32, i32
  }
  func.func @transform_5(%arg0: i32) -> (i32, i32) {
    %c0_i32 = arith.constant 0 : i32
    %c0_i32_0 = arith.constant 0 : i32
    %c0_i32_1 = arith.constant 0 : i32
    return %c0_i32, %c0_i32_0 : i32, i32
  }
  func.func @transform_6(%arg0: i32) -> (i32, i32) {
    %c0_i32 = arith.constant 0 : i32
    %c0_i32_0 = arith.constant 0 : i32
    %c0_i32_1 = arith.constant 0 : i32
    return %c0_i32, %c0_i32_0 : i32, i32
  }
  func.func @transform_7(%arg0: i32) -> (i32, i32) {
    %c0_i32 = arith.constant 0 : i32
    %c0_i32_0 = arith.constant 0 : i32
    %c0_i32_1 = arith.constant 0 : i32
    return %c0_i32, %c0_i32_0 : i32, i32
  }
  func.func @transform_8(%arg0: i32) -> (i32, i32) {
    %c0_i32 = arith.constant 0 : i32
    %c0_i32_0 = arith.constant 0 : i32
    %c0_i32_1 = arith.constant 0 : i32
    return %c0_i32, %c0_i32_0 : i32, i32
  }
  func.func @transform_9(%arg0: i32) -> (i32, i32) {
    %c0_i32 = arith.constant 0 : i32
    %c0_i32_0 = arith.constant 0 : i32
    return %arg0, %c0_i32 : i32, i32
  }
}

</mosaic_0001>

<llo_original>
// kernel: tpu_custom_call.1
$region0: #{tpu_custom_call.1}
  #allocation0 [shape = 'u32[]', space=smem, size = 0x4, offset = 0x4, fixed_abs, tag = 'smem constant byte address 0x4 - core index']
  #allocation1 [shape = 'u32[72,128]{1,0:T(1,128)}', space=vmem, size = 0x9000, scoped, tag = 'internal scratch']
  %s0 = inlined_call_operand.hbm [shape: f32[16,64], index: 0, kind: input, shape index: {}]
  %s1 = inlined_call_operand.hbm [shape: bf16[64,256], index: 1, kind: input, shape index: {}]
  %s2 = inlined_call_operand.hbm [shape: f32[1,256], index: 2, kind: input, shape index: {}]
  %s3 = inlined_call_operand.hbm [shape: bf16[256,256], index: 3, kind: input, shape index: {}]
  %s4 = inlined_call_operand.vmem [shape: f32[1,256], index: 4, kind: input, shape index: {}]
  %s5 = inlined_call_operand.hbm [shape: bf16[256,256], index: 5, kind: input, shape index: {}]
  %s6 = inlined_call_operand.vmem [shape: f32[1,256], index: 6, kind: input, shape index: {}]
  %s7 = inlined_call_operand.hbm [shape: bf16[256,128], index: 7, kind: input, shape index: {}]
  %s8 = inlined_call_operand.vmem [shape: f32[1,128], index: 8, kind: input, shape index: {}]
  %s9 = inlined_call_operand.hbm [shape: f32[16,128], index: 9, kind: output, shape index: {}]
  %s10 = sld [smem:[#allocation0]]
  $region70: #{tpu_custom_call.1} parent=0
    _
  %s12 = ssub.s32 1, %s10
  %s13 = scalar_select 0, %s12, %s10
  $region1: #{tpu_custom_call.1} parent=0
    #allocation2 [shape = 'u8[8192]{0}', space=vmem, size = 0x2000, scoped, tag = 'input window, operand 0, single buffered']
    #allocation3 [shape = 's32[1]{0}', space=sflag, size = 0x4, scoped, tag = 'scoped memory for tpu_custom_call.1']
    #allocation4 [shape = 's32[1]{0}', space=sflag, size = 0x4, scoped, tag = 'scoped memory for tpu_custom_call.1']
    #allocation5 [shape = 'u8[32768]{0}', space=vmem, size = 0x8000, scoped, tag = 'input window, operand 1, single buffered']
    #allocation6 [shape = 's32[1]{0}', space=sflag, size = 0x4, scoped, tag = 'scoped memory for tpu_custom_call.1']
    #allocation7 [shape = 'u8[1024]{0}', space=vmem, size = 0x400, scoped, tag = 'input window, operand 2, single buffered']
    #allocation8 [shape = 'u8[131072]{0}', space=vmem, size = 0x20000, scoped, tag = 'input window, operand 3, single buffered']
    #allocation9 [shape = 's32[1]{0}', space=sflag, size = 0x4, scoped, tag = 'scoped memory for tpu_custom_call.1']
    #allocation10 [shape = 'u8[131072]{0}', space=vmem, size = 0x20000, scoped, tag = 'input window, operand 5, single buffered']
    #allocation11 [shape = 'u8[65536]{0}', space=vmem, size = 0x10000, scoped, tag = 'input window, operand 7, single buffered']
    #allocation12 [shape = 's32[1]{0}', space=sflag, size = 0x4, scoped, tag = 'scoped memory for tpu_custom_call.1']
    #allocation13 [shape = 'u8[8192]{0}', space=vmem, size = 0x2000, scoped, tag = 'output window, operand 0, single buffered']
    %14 = vsyncpa [#allocation3], 0
    %15 = vsyncpa [#allocation6], 0
    %16 = vsyncpa [#allocation9], 0
    %17 = vsyncpa [#allocation12], 0
    %18 = vsyncpa [#allocation4], 0
    // Predicated region
    $region2: #{tpu_custom_call.1} parent=1 // pred_check
      _
    $region3: #{tpu_custom_call.1} parent=1 // pred_check_branch
      %20 = sbr.rel (0) target = $region5
    $region4: #{tpu_custom_call.1} parent=1 // pred_region
      %22 = vsyncadd [#allocation3], 0
      %s23 = sshll.u32 %s0, 4
      %s24 = int_to_ptr.hbm [resolvable:$true] %s23
      %s25 = sshll.u32 [#allocation2], 4
      %s26 = int_to_ptr.vmem [resolvable:$true] %s25
      %31 = dma.hbm_to_vmem [thread:$0]  %s24, 256, %s26, [#allocation3], 128, 128, 8
    $region5: #{tpu_custom_call.1} parent=1 // pred_fallthru
      _
    // Predicated region
    $region6: #{tpu_custom_call.1} parent=1 // pred_check
      _
    $region7: #{tpu_custom_call.1} parent=1 // pred_check_branch
      %33 = sbr.rel (0) target = $region9
    $region8: #{tpu_custom_call.1} parent=1 // pred_region
      %35 = vsyncadd [#allocation6], 0
      %s36 = sshll.u32 %s1, 4
      %s37 = int_to_ptr.hbm [resolvable:$true] %s36
      %s38 = sshll.u32 [#allocation5], 4
      %s39 = int_to_ptr.vmem [resolvable:$true] %s38
      %44 = dma.hbm_to_vmem [thread:$0]  %s37, 1024, %s39, [#allocation6], 128, 128, 8
    $region9: #{tpu_custom_call.1} parent=1 // pred_fallthru
      _
    // Predicated region
    $region10: #{tpu_custom_call.1} parent=1 // pred_check
      _
    $region11: #{tpu_custom_call.1} parent=1 // pred_check_branch
      %46 = sbr.rel (0) target = $region13
    $region12: #{tpu_custom_call.1} parent=1 // pred_region
      %48 = vsyncadd [#allocation6], 0
      %s50 = sshll.u32 %s2, 4
      %s51 = int_to_ptr.hbm [resolvable:$true] %s50
      %s52 = sshll.u32 [#allocation7], 4
      %s53 = int_to_ptr.vmem [resolvable:$true] %s52
      %55 = dma.hbm_to_vmem [thread:$0]  %s51, 32, %s53, [#allocation6]
    $region13: #{tpu_custom_call.1} parent=1 // pred_fallthru
      _
    // Predicated region
    $region14: #{tpu_custom_call.1} parent=1 // pred_check
      _
    $region15: #{tpu_custom_call.1} parent=1 // pred_check_branch
      %57 = sbr.rel (0) target = $region17
    $region16: #{tpu_custom_call.1} parent=1 // pred_region
      %59 = vsyncadd [#allocation9], 0
      %s60 = sshll.u32 %s3, 4
      %s61 = int_to_ptr.hbm [resolvable:$true] %s60
      %s62 = sshll.u32 [#allocation8], 4
      %s63 = int_to_ptr.vmem [resolvable:$true] %s62
      %68 = dma.hbm_to_vmem [thread:$0]  %s61, 4096, %s63, [#allocation9], 128, 128, 8
    $region17: #{tpu_custom_call.1} parent=1 // pred_fallthru
      _
    // Predicated region
    $region18: #{tpu_custom_call.1} parent=1 // pred_check
      _
    $region19: #{tpu_custom_call.1} parent=1 // pred_check_branch
      %70 = sbr.rel (0) target = $region21
    $region20: #{tpu_custom_call.1} parent=1 // pred_region
      _
    $region21: #{tpu_custom_call.1} parent=1 // pred_fallthru
      _
    // Predicated region
    $region22: #{tpu_custom_call.1} parent=1 // pred_check
      _
    $region23: #{tpu_custom_call.1} parent=1 // pred_check_branch
      %72 = sbr.rel (0) target = $region25
    $region24: #{tpu_custom_call.1} parent=1 // pred_region
      %74 = vsyncadd [#allocation9], 0
      %s75 = sshll.u32 %s5, 4
      %s76 = int_to_ptr.hbm [resolvable:$true] %s75
      %s77 = sshll.u32 [#allocation10], 4
      %s78 = int_to_ptr.vmem [resolvable:$true] %s77
      %83 = dma.hbm_to_vmem [thread:$0]  %s76, 4096, %s78, [#allocation9], 128, 128, 8
    $region25: #{tpu_custom_call.1} parent=1 // pred_fallthru
      _
    // Predicated region
    $region26: #{tpu_custom_call.1} parent=1 // pred_check
      _
    $region27: #{tpu_custom_call.1} parent=1 // pred_check_branch
      %85 = sbr.rel (0) target = $region29
    $region28: #{tpu_custom_call.1} parent=1 // pred_region
      _
    $region29: #{tpu_custom_call.1} parent=1 // pred_fallthru
      _
    // Predicated region
    $region30: #{tpu_custom_call.1} parent=1 // pred_check
      _
    $region31: #{tpu_custom_call.1} parent=1 // pred_check_branch
      %87 = sbr.rel (0) target = $region33
    $region32: #{tpu_custom_call.1} parent=1 // pred_region
      %89 = vsyncadd [#allocation12], 0
      %s90 = sshll.u32 %s7, 4
      %s91 = int_to_ptr.hbm [resolvable:$true] %s90
      %s92 = sshll.u32 [#allocation11], 4
      %s93 = int_to_ptr.vmem [resolvable:$true] %s92
      %98 = dma.hbm_to_vmem [thread:$0]  %s91, 2048, %s93, [#allocation12], 64, 64, 4
    $region33: #{tpu_custom_call.1} parent=1 // pred_fallthru
      _
    // Predicated region
    $region34: #{tpu_custom_call.1} parent=1 // pred_check
      _
    $region35: #{tpu_custom_call.1} parent=1 // pred_check_branch
      %100 = sbr.rel (0) target = $region37
    $region36: #{tpu_custom_call.1} parent=1 // pred_region
      _
    $region37: #{tpu_custom_call.1} parent=1 // pred_fallthru
      _
    // Predicated region
    $region38: #{tpu_custom_call.1} parent=1 // pred_check
      _
    $region39: #{tpu_custom_call.1} parent=1 // pred_check_branch
      %102 = sbr.rel (0) target = $region41
    $region40: #{tpu_custom_call.1} parent=1 // pred_region
      %104 = dma.done [#allocation3], 256
    $region41: #{tpu_custom_call.1} parent=1 // pred_fallthru
      _
    // Predicated region
    $region42: #{tpu_custom_call.1} parent=1 // pred_check
      _
    $region43: #{tpu_custom_call.1} parent=1 // pred_check_branch
      %106 = sbr.rel (0) target = $region45
    $region44: #{tpu_custom_call.1} parent=1 // pred_region
      %108 = dma.done [#allocation6], 1024
    $region45: #{tpu_custom_call.1} parent=1 // pred_fallthru
      _
    // Predicated region
    $region46: #{tpu_custom_call.1} parent=1 // pred_check
      _
    $region47: #{tpu_custom_call.1} parent=1 // pred_check_branch
      %110 = sbr.rel (0) target = $region49
    $region48: #{tpu_custom_call.1} parent=1 // pred_region
      %112 = dma.done [#allocation6], 32
    $region49: #{tpu_custom_call.1} parent=1 // pred_fallthru
      _
    // Predicated region
    $region50: #{tpu_custom_call.1} parent=1 // pred_check
      _
    $region51: #{tpu_custom_call.1} parent=1 // pred_check_branch
      %114 = sbr.rel (0) target = $region53
    $region52: #{tpu_custom_call.1} parent=1 // pred_region
      %116 = dma.done [#allocation9], 4096
    $region53: #{tpu_custom_call.1} parent=1 // pred_fallthru
      _
    // Predicated region
    $region54: #{tpu_custom_call.1} parent=1 // pred_check
      _
    $region55: #{tpu_custom_call.1} parent=1 // pred_check_branch
      %118 = sbr.rel (0) target = $region57
    $region56: #{tpu_custom_call.1} parent=1 // pred_region
      %120 = dma.done [#allocation9], 4096
    $region57: #{tpu_custom_call.1} parent=1 // pred_fallthru
      _
    // Predicated region
    $region58: #{tpu_custom_call.1} parent=1 // pred_check
      _
    $region59: #{tpu_custom_call.1} parent=1 // pred_check_branch
      %122 = sbr.rel (0) target = $region61
    $region60: #{tpu_custom_call.1} parent=1 // pred_region
      %124 = dma.done [#allocation12], 2048
    $region61: #{tpu_custom_call.1} parent=1 // pred_fallthru
      _
    %v126 = vld [vmem:[#allocation2] sm:$0xff]
    %v127 = vld [vmem:[#allocation2 + $0x8] sm:$0xff]
    %v128 = vpack.c.bf16 %v127, %v126
    %v129 = vld [vmem:[#allocation5] sm:$0xff]
    %v130 = vld [vmem:[#allocation5 + $0x8] sm:$0xff]
    %v131 = vld [vmem:[#allocation5 + $0x10] sm:$0xff]
    %v132 = vld [vmem:[#allocation5 + $0x18] sm:$0xff]
    %v133 = vld [vmem:[#allocation5 + $0x20] sm:$0xff]
    %v134 = vld [vmem:[#allocation5 + $0x28] sm:$0xff]
    %v135 = vld [vmem:[#allocation5 + $0x30] sm:$0xff]
    %v136 = vld [vmem:[#allocation5 + $0x38] sm:$0xff]
    %v137 = vld [vmem:[#allocation7] sm:$0x3]
    %v139 = vperm.slane %v137, 0
    %v140 = vperm.slane %v137, 1
    %v151 = vunpack.c.l.b16 %v129
    %v152 = vunpack.c.h.b16 %v129
    %v153 = vunpack.c.l.b16 %v130
    %v154 = vunpack.c.h.b16 %v130
    %v155 = vunpack.c.l.b16 %v131
    %v156 = vunpack.c.h.b16 %v131
    %v157 = vunpack.c.l.b16 %v132
    %v158 = vunpack.c.h.b16 %v132
    %v159 = vunpack.c.l.b16 %v133
    %v160 = vunpack.c.h.b16 %v133
    %v161 = vunpack.c.l.b16 %v134
    %v162 = vunpack.c.h.b16 %v134
    %v163 = vunpack.c.l.b16 %v135
    %v164 = vunpack.c.h.b16 %v135
    %v165 = vunpack.c.l.b16 %v136
    %v166 = vunpack.c.h.b16 %v136
    %v167 = vpack.c.b16 %v153, %v151
    %v168 = vpack.c.b16 %v154, %v152
    %v169 = vpack.c.b16 %v157, %v155
    %v170 = vpack.c.b16 %v158, %v156
    %v171 = vpack.c.b16 %v161, %v159
    %v172 = vpack.c.b16 %v162, %v160
    %v173 = vpack.c.b16 %v165, %v163
    %v174 = vpack.c.b16 %v166, %v164
    %vm183 = vcmask 523264
    %v185 = vsel %vm183, %v128, 0
    %187 = vmatpush.bf16.msra.mxu0 0
    %188 = vmatpush.bf16.msra.mxu0 0
    %189 = vmatpush.bf16.msra.mxu0 0
    %190 = vmatpush.bf16.msra.mxu0 0
    %191 = vmatpush.bf16.msra.mxu0 %v173
    %192 = vmatpush.bf16.msra.mxu0 %v171
    %193 = vmatpush.bf16.msra.mxu0 %v169
    %194 = vmatpush.bf16.msra.mxu0 %v167
    %195 = vmatmul.bf16.gmra.mxu0 %v185
    %v196 = vpop.f32.mrf.mxu0
    %v197 = vadd.f32 %v139, %v196
    %v198 = vpop.f32.mrf.mxu0
    %v199 = vadd.f32 %v139, %v198
    %200 = vdwg.mxu0
    %201 = vmatpush.bf16.msra.mxu0 0
    %202 = vmatpush.bf16.msra.mxu0 0
    %203 = vmatpush.bf16.msra.mxu0 0
    %204 = vmatpush.bf16.msra.mxu0 0
    %205 = vmatpush.bf16.msra.mxu0 %v174
    %206 = vmatpush.bf16.msra.mxu0 %v172
    %207 = vmatpush.bf16.msra.mxu0 %v170
    %208 = vmatpush.bf16.msra.mxu0 %v168
    %209 = vmatmul.bf16.gmra.mxu0 %v185
    %v210 = vpop.f32.mrf.mxu0
    %v211 = vadd.f32 %v140, %v210
    %v212 = vpop.f32.mrf.mxu0
    %v213 = vadd.f32 %v140, %v212
    %214 = vdwg.mxu0
    %v215 = vmax.f32 %v197, 0.0
    %v216 = vmax.f32 %v211, 0.0
    %v217 = vmax.f32 %v199, 0.0
    %v218 = vmax.f32 %v213, 0.0
    %v219 = vpack.c.bf16 %v217, %v215
    %v220 = vpack.c.bf16 %v218, %v216
    %v221 = vld [vmem:[#allocation8] sm:$0xff]
    %v222 = vld [vmem:[#allocation8 + $0x8] sm:$0xff]
    %v223 = vld [vmem:[#allocation8 + $0x10] sm:$0xff]
    %v224 = vld [vmem:[#allocation8 + $0x18] sm:$0xff]
    %v225 = vld [vmem:[#allocation8 + $0x20] sm:$0xff]
    %v226 = vld [vmem:[#allocation8 + $0x28] sm:$0xff]
    %v227 = vld [vmem:[#allocation8 + $0x30] sm:$0xff]
    %v228 = vld [vmem:[#allocation8 + $0x38] sm:$0xff]
    %v229 = vld [vmem:[#allocation8 + $0x40] sm:$0xff]
    %v230 = vld [vmem:[#allocation8 + $0x48] sm:$0xff]
    %v231 = vld [vmem:[#allocation8 + $0x50] sm:$0xff]
    %v232 = vld [vmem:[#allocation8 + $0x58] sm:$0xff]
    %v233 = vld [vmem:[#allocation8 + $0x60] sm:$0xff]
    %v234 = vld [vmem:[#allocation8 + $0x68] sm:$0xff]
    %v235 = vld [vmem:[#allocation8 + $0x70] sm:$0xff]
    %v236 = vld [vmem:[#allocation8 + $0x78] sm:$0xff]
    %v237 = vld [vmem:[#allocation8 + $0x80] sm:$0xff]
    %v238 = vld [vmem:[#allocation8 + $0x88] sm:$0xff]
    %v239 = vld [vmem:[#allocation8 + $0x90] sm:$0xff]
    %v240 = vld [vmem:[#allocation8 + $0x98] sm:$0xff]
    %v241 = vld [vmem:[#allocation8 + $0xa0] sm:$0xff]
    %v242 = vld [vmem:[#allocation8 + $0xa8] sm:$0xff]
    %v243 = vld [vmem:[#allocation8 + $0xb0] sm:$0xff]
    %v244 = vld [vmem:[#allocation8 + $0xb8] sm:$0xff]
    %v245 = vld [vmem:[#allocation8 + $0xc0] sm:$0xff]
    %v246 = vld [vmem:[#allocation8 + $0xc8] sm:$0xff]
    %v247 = vld [vmem:[#allocation8 + $0xd0] sm:$0xff]
    %v248 = vld [vmem:[#allocation8 + $0xd8] sm:$0xff]
    %v249 = vld [vmem:[#allocation8 + $0xe0] sm:$0xff]
    %v250 = vld [vmem:[#allocation8 + $0xe8] sm:$0xff]
    %v251 = vld [vmem:[#allocation8 + $0xf0] sm:$0xff]
    %v252 = vld [vmem:[#allocation8 + $0xf8] sm:$0xff]
    %v253 = vld [vmem:[%s4] sm:$0x3]
    %v255 = vperm.slane %v253, 0
    %v256 = vperm.slane %v253, 1
    %v291 = vunpack.c.l.b16 %v221
    %v292 = vunpack.c.h.b16 %v221
    %v293 = vunpack.c.l.b16 %v222
    %v294 = vunpack.c.h.b16 %v222
    %v295 = vunpack.c.l.b16 %v223
    %v296 = vunpack.c.h.b16 %v223
    %v297 = vunpack.c.l.b16 %v224
    %v298 = vunpack.c.h.b16 %v224
    %v299 = vunpack.c.l.b16 %v225
    %v300 = vunpack.c.h.b16 %v225
    %v301 = vunpack.c.l.b16 %v226
    %v302 = vunpack.c.h.b16 %v226
    %v303 = vunpack.c.l.b16 %v227
    %v304 = vunpack.c.h.b16 %v227
    %v305 = vunpack.c.l.b16 %v228
    %v306 = vunpack.c.h.b16 %v228
    %v307 = vunpack.c.l.b16 %v229
    %v308 = vunpack.c.h.b16 %v229
    %v309 = vunpack.c.l.b16 %v230
    %v310 = vunpack.c.h.b16 %v230
    %v311 = vunpack.c.l.b16 %v231
    %v312 = vunpack.c.h.b16 %v231
    %v313 = vunpack.c.l.b16 %v232
    %v314 = vunpack.c.h.b16 %v232
    %v315 = vunpack.c.l.b16 %v233
    %v316 = vunpack.c.h.b16 %v233
    %v317 = vunpack.c.l.b16 %v234
    %v318 = vunpack.c.h.b16 %v234
    %v319 = vunpack.c.l.b16 %v235
    %v320 = vunpack.c.h.b16 %v235
    %v321 = vunpack.c.l.b16 %v236
    %v322 = vunpack.c.h.b16 %v236
    %v323 = vunpack.c.l.b16 %v237
    %v324 = vunpack.c.h.b16 %v237
    %v325 = vunpack.c.l.b16 %v238
    %v326 = vunpack.c.h.b16 %v238
    %v327 = vunpack.c.l.b16 %v239
    %v328 = vunpack.c.h.b16 %v239
    %v329 = vunpack.c.l.b16 %v240
    %v330 = vunpack.c.h.b16 %v240
    %v331 = vunpack.c.l.b16 %v241
    %v332 = vunpack.c.h.b16 %v241
    %v333 = vunpack.c.l.b16 %v242
    %v334 = vunpack.c.h.b16 %v242
    %v335 = vunpack.c.l.b16 %v243
    %v336 = vunpack.c.h.b16 %v243
    %v337 = vunpack.c.l.b16 %v244
    %v338 = vunpack.c.h.b16 %v244
    %v339 = vunpack.c.l.b16 %v245
    %v340 = vunpack.c.h.b16 %v245
    %v341 = vunpack.c.l.b16 %v246
    %v342 = vunpack.c.h.b16 %v246
    %v343 = vunpack.c.l.b16 %v247
    %v344 = vunpack.c.h.b16 %v247
    %v345 = vunpack.c.l.b16 %v248
    %v346 = vunpack.c.h.b16 %v248
    %v347 = vunpack.c.l.b16 %v249
    %v348 = vunpack.c.h.b16 %v249
    %v349 = vunpack.c.l.b16 %v250
    %v350 = vunpack.c.h.b16 %v250
    %v351 = vunpack.c.l.b16 %v251
    %v352 = vunpack.c.h.b16 %v251
    %v353 = vunpack.c.l.b16 %v252
    %v354 = vunpack.c.h.b16 %v252
    %v355 = vpack.c.b16 %v293, %v291
    %v356 = vpack.c.b16 %v294, %v292
    %v357 = vpack.c.b16 %v297, %v295
    %v358 = vpack.c.b16 %v298, %v296
    %v359 = vpack.c.b16 %v301, %v299
    %v360 = vpack.c.b16 %v302, %v300
    %v361 = vpack.c.b16 %v305, %v303
    %v362 = vpack.c.b16 %v306, %v304
    %v363 = vpack.c.b16 %v309, %v307
    %v364 = vpack.c.b16 %v310, %v308
    %v365 = vpack.c.b16 %v313, %v311
    %v366 = vpack.c.b16 %v314, %v312
    %v367 = vpack.c.b16 %v317, %v315
    %v368 = vpack.c.b16 %v318, %v316
    %v369 = vpack.c.b16 %v321, %v319
    %v370 = vpack.c.b16 %v322, %v320
    %v371 = vpack.c.b16 %v325, %v323
    %v372 = vpack.c.b16 %v326, %v324
    %v373 = vpack.c.b16 %v329, %v327
    %v374 = vpack.c.b16 %v330, %v328
    %v375 = vpack.c.b16 %v333, %v331
    %v376 = vpack.c.b16 %v334, %v332
    %v377 = vpack.c.b16 %v337, %v335
    %v378 = vpack.c.b16 %v338, %v336
    %v379 = vpack.c.b16 %v341, %v339
    %v380 = vpack.c.b16 %v342, %v340
    %v381 = vpack.c.b16 %v345, %v343
    %v382 = vpack.c.b16 %v346, %v344
    %v383 = vpack.c.b16 %v349, %v347
    %v384 = vpack.c.b16 %v350, %v348
    %v385 = vpack.c.b16 %v353, %v351
    %v386 = vpack.c.b16 %v354, %v352
    %419 = vmatpush.bf16.msra.mxu0 %v369
    %420 = vmatpush.bf16.msra.mxu0 %v367
    %421 = vmatpush.bf16.msra.mxu0 %v365
    %422 = vmatpush.bf16.msra.mxu0 %v363
    %423 = vmatpush.bf16.msra.mxu0 %v361
    %424 = vmatpush.bf16.msra.mxu0 %v359
    %425 = vmatpush.bf16.msra.mxu0 %v357
    %426 = vmatpush.bf16.msra.mxu0 %v355
    %427 = vmatmul.bf16.gmra.mxu0 %v219
    %v428 = vpop.f32.mrf.mxu0
    %v429 = vadd.f32 %v255, %v428
    %v430 = vpop.f32.mrf.mxu0
    %v431 = vadd.f32 %v255, %v430
    %432 = vdwg.mxu0
    %433 = vmatpush.bf16.msra.mxu0 %v385
    %434 = vmatpush.bf16.msra.mxu0 %v383
    %435 = vmatpush.bf16.msra.mxu0 %v381
    %436 = vmatpush.bf16.msra.mxu0 %v379
    %437 = vmatpush.bf16.msra.mxu0 %v377
    %438 = vmatpush.bf16.msra.mxu0 %v375
    %439 = vmatpush.bf16.msra.mxu0 %v373
    %440 = vmatpush.bf16.msra.mxu0 %v371
    %441 = vmatmul.bf16.gmra.mxu0 %v220
    %v442 = vpop.f32.mrf.mxu0
    %v443 = vadd.f32 %v429, %v442
    %v444 = vpop.f32.mrf.mxu0
    %v445 = vadd.f32 %v431, %v444
    %446 = vdwg.mxu0
    %447 = vmatpush.bf16.msra.mxu0 %v370
    %448 = vmatpush.bf16.msra.mxu0 %v368
    %449 = vmatpush.bf16.msra.mxu0 %v366
    %450 = vmatpush.bf16.msra.mxu0 %v364
    %451 = vmatpush.bf16.msra.mxu0 %v362
    %452 = vmatpush.bf16.msra.mxu0 %v360
    %453 = vmatpush.bf16.msra.mxu0 %v358
    %454 = vmatpush.bf16.msra.mxu0 %v356
    %455 = vmatmul.bf16.gmra.mxu0 %v219
    %v456 = vpop.f32.mrf.mxu0
    %v457 = vadd.f32 %v256, %v456
    %v458 = vpop.f32.mrf.mxu0
    %v459 = vadd.f32 %v256, %v458
    %460 = vdwg.mxu0
    %461 = vmatpush.bf16.msra.mxu0 %v386
    %462 = vmatpush.bf16.msra.mxu0 %v384
    %463 = vmatpush.bf16.msra.mxu0 %v382
    %464 = vmatpush.bf16.msra.mxu0 %v380
    %465 = vmatpush.bf16.msra.mxu0 %v378
    %466 = vmatpush.bf16.msra.mxu0 %v376
    %467 = vmatpush.bf16.msra.mxu0 %v374
    %468 = vmatpush.bf16.msra.mxu0 %v372
    %469 = vmatmul.bf16.gmra.mxu0 %v220
    %v470 = vpop.f32.mrf.mxu0
    %v471 = vadd.f32 %v457, %v470
    %v472 = vpop.f32.mrf.mxu0
    %v473 = vadd.f32 %v459, %v472
    %474 = vdwg.mxu0
    %v475 = vmax.f32 %v443, 0.0
    %v476 = vmax.f32 %v471, 0.0
    %v477 = vmax.f32 %v445, 0.0
    %v478 = vmax.f32 %v473, 0.0
    %v479 = vpack.c.bf16 %v477, %v475
    %v480 = vpack.c.bf16 %v478, %v476
    %v481 = vld [vmem:[#allocation10] sm:$0xff]
    %v482 = vld [vmem:[#allocation10 + $0x8] sm:$0xff]
    %v483 = vld [vmem:[#allocation10 + $0x10] sm:$0xff]
    %v484 = vld [vmem:[#allocation10 + $0x18] sm:$0xff]
    %v485 = vld [vmem:[#allocation10 + $0x20] sm:$0xff]
    %v486 = vld [vmem:[#allocation10 + $0x28] sm:$0xff]
    %v487 = vld [vmem:[#allocation10 + $0x30] sm:$0xff]
    %v488 = vld [vmem:[#allocation10 + $0x38] sm:$0xff]
    %v489 = vld [vmem:[#allocation10 + $0x40] sm:$0xff]
    %v490 = vld [vmem:[#allocation10 + $0x48] sm:$0xff]
    %v491 = vld [vmem:[#allocation10 + $0x50] sm:$0xff]
    %v492 = vld [vmem:[#allocation10 + $0x58] sm:$0xff]
    %v493 = vld [vmem:[#allocation10 + $0x60] sm:$0xff]
    %v494 = vld [vmem:[#allocation10 + $0x68] sm:$0xff]
    %v495 = vld [vmem:[#allocation10 + $0x70] sm:$0xff]
    %v496 = vld [vmem:[#allocation10 + $0x78] sm:$0xff]
    %v497 = vld [vmem:[#allocation10 + $0x80] sm:$0xff]
    %v498 = vld [vmem:[#allocation10 + $0x88] sm:$0xff]
    %v499 = vld [vmem:[#allocation10 + $0x90] sm:$0xff]
    %v500 = vld [vmem:[#allocation10 + $0x98] sm:$0xff]
    %v501 = vld [vmem:[#allocation10 + $0xa0] sm:$0xff]
    %v502 = vld [vmem:[#allocation10 + $0xa8] sm:$0xff]
    %v503 = vld [vmem:[#allocation10 + $0xb0] sm:$0xff]
    %v504 = vld [vmem:[#allocation10 + $0xb8] sm:$0xff]
    %v505 = vld [vmem:[#allocation10 + $0xc0] sm:$0xff]
    %v506 = vld [vmem:[#allocation10 + $0xc8] sm:$0xff]
    %v507 = vld [vmem:[#allocation10 + $0xd0] sm:$0xff]
    %v508 = vld [vmem:[#allocation10 + $0xd8] sm:$0xff]
    %v509 = vld [vmem:[#allocation10 + $0xe0] sm:$0xff]
    %v510 = vld [vmem:[#allocation10 + $0xe8] sm:$0xff]
    %v511 = vld [vmem:[#allocation10 + $0xf0] sm:$0xff]
    %v512 = vld [vmem:[#allocation10 + $0xf8] sm:$0xff]
    %v513 = vld [vmem:[%s6] sm:$0x3]
    %v515 = vperm.slane %v513, 0
    %v516 = vperm.slane %v513, 1
    %v551 = vunpack.c.l.b16 %v481
    %v552 = vunpack.c.h.b16 %v481
    %v553 = vunpack.c.l.b16 %v482
    %v554 = vunpack.c.h.b16 %v482
    %v555 = vunpack.c.l.b16 %v483
    %v556 = vunpack.c.h.b16 %v483
    %v557 = vunpack.c.l.b16 %v484
    %v558 = vunpack.c.h.b16 %v484
    %v559 = vunpack.c.l.b16 %v485
    %v560 = vunpack.c.h.b16 %v485
    %v561 = vunpack.c.l.b16 %v486
    %v562 = vunpack.c.h.b16 %v486
    %v563 = vunpack.c.l.b16 %v487
    %v564 = vunpack.c.h.b16 %v487
    %v565 = vunpack.c.l.b16 %v488
    %v566 = vunpack.c.h.b16 %v488
    %v567 = vunpack.c.l.b16 %v489
    %v568 = vunpack.c.h.b16 %v489
    %v569 = vunpack.c.l.b16 %v490
    %v570 = vunpack.c.h.b16 %v490
    %v571 = vunpack.c.l.b16 %v491
    %v572 = vunpack.c.h.b16 %v491
    %v573 = vunpack.c.l.b16 %v492
    %v574 = vunpack.c.h.b16 %v492
    %v575 = vunpack.c.l.b16 %v493
    %v576 = vunpack.c.h.b16 %v493
    %v577 = vunpack.c.l.b16 %v494
    %v578 = vunpack.c.h.b16 %v494
    %v579 = vunpack.c.l.b16 %v495
    %v580 = vunpack.c.h.b16 %v495
    %v581 = vunpack.c.l.b16 %v496
    %v582 = vunpack.c.h.b16 %v496
    %v583 = vunpack.c.l.b16 %v497
    %v584 = vunpack.c.h.b16 %v497
    %v585 = vunpack.c.l.b16 %v498
    %v586 = vunpack.c.h.b16 %v498
    %v587 = vunpack.c.l.b16 %v499
    %v588 = vunpack.c.h.b16 %v499
    %v589 = vunpack.c.l.b16 %v500
    %v590 = vunpack.c.h.b16 %v500
    %v591 = vunpack.c.l.b16 %v501
    %v592 = vunpack.c.h.b16 %v501
    %v593 = vunpack.c.l.b16 %v502
    %v594 = vunpack.c.h.b16 %v502
    %v595 = vunpack.c.l.b16 %v503
    %v596 = vunpack.c.h.b16 %v503
    %v597 = vunpack.c.l.b16 %v504
    %v598 = vunpack.c.h.b16 %v504
    %v599 = vunpack.c.l.b16 %v505
    %v600 = vunpack.c.h.b16 %v505
    %v601 = vunpack.c.l.b16 %v506
    %v602 = vunpack.c.h.b16 %v506
    %v603 = vunpack.c.l.b16 %v507
    %v604 = vunpack.c.h.b16 %v507
    %v605 = vunpack.c.l.b16 %v508
    %v606 = vunpack.c.h.b16 %v508
    %v607 = vunpack.c.l.b16 %v509
    %v608 = vunpack.c.h.b16 %v509
    %v609 = vunpack.c.l.b16 %v510
    %v610 = vunpack.c.h.b16 %v510
    %v611 = vunpack.c.l.b16 %v511
    %v612 = vunpack.c.h.b16 %v511
    %v613 = vunpack.c.l.b16 %v512
    %v614 = vunpack.c.h.b16 %v512
    %v615 = vpack.c.b16 %v553, %v551
    %v616 = vpack.c.b16 %v554, %v552
    %v617 = vpack.c.b16 %v557, %v555
    %v618 = vpack.c.b16 %v558, %v556
    %v619 = vpack.c.b16 %v561, %v559
    %v620 = vpack.c.b16 %v562, %v560
    %v621 = vpack.c.b16 %v565, %v563
    %v622 = vpack.c.b16 %v566, %v564
    %v623 = vpack.c.b16 %v569, %v567
    %v624 = vpack.c.b16 %v570, %v568
    %v625 = vpack.c.b16 %v573, %v571
    %v626 = vpack.c.b16 %v574, %v572
    %v627 = vpack.c.b16 %v577, %v575
    %v628 = vpack.c.b16 %v578, %v576
    %v629 = vpack.c.b16 %v581, %v579
    %v630 = vpack.c.b16 %v582, %v580
    %v631 = vpack.c.b16 %v585, %v583
    %v632 = vpack.c.b16 %v586, %v584
    %v633 = vpack.c.b16 %v589, %v587
    %v634 = vpack.c.b16 %v590, %v588
    %v635 = vpack.c.b16 %v593, %v591
    %v636 = vpack.c.b16 %v594, %v592
    %v637 = vpack.c.b16 %v597, %v595
    %v638 = vpack.c.b16 %v598, %v596
    %v639 = vpack.c.b16 %v601, %v599
    %v640 = vpack.c.b16 %v602, %v600
    %v641 = vpack.c.b16 %v605, %v603
    %v642 = vpack.c.b16 %v606, %v604
    %v643 = vpack.c.b16 %v609, %v607
    %v644 = vpack.c.b16 %v610, %v608
    %v645 = vpack.c.b16 %v613, %v611
    %v646 = vpack.c.b16 %v614, %v612
    %679 = vmatpush.bf16.msra.mxu0 %v629
    %680 = vmatpush.bf16.msra.mxu0 %v627
    %681 = vmatpush.bf16.msra.mxu0 %v625
    %682 = vmatpush.bf16.msra.mxu0 %v623
    %683 = vmatpush.bf16.msra.mxu0 %v621
    %684 = vmatpush.bf16.msra.mxu0 %v619
    %685 = vmatpush.bf16.msra.mxu0 %v617
    %686 = vmatpush.bf16.msra.mxu0 %v615
    %687 = vmatmul.bf16.gmra.mxu0 %v479
    %v688 = vpop.f32.mrf.mxu0
    %v689 = vadd.f32 %v515, %v688
    %v690 = vpop.f32.mrf.mxu0
    %v691 = vadd.f32 %v515, %v690
    %692 = vdwg.mxu0
    %693 = vmatpush.bf16.msra.mxu0 %v645
    %694 = vmatpush.bf16.msra.mxu0 %v643
    %695 = vmatpush.bf16.msra.mxu0 %v641
    %696 = vmatpush.bf16.msra.mxu0 %v639
    %697 = vmatpush.bf16.msra.mxu0 %v637
    %698 = vmatpush.bf16.msra.mxu0 %v635
    %699 = vmatpush.bf16.msra.mxu0 %v633
    %700 = vmatpush.bf16.msra.mxu0 %v631
    %701 = vmatmul.bf16.gmra.mxu0 %v480
    %v702 = vpop.f32.mrf.mxu0
    %v703 = vadd.f32 %v689, %v702
    %v704 = vpop.f32.mrf.mxu0
    %v705 = vadd.f32 %v691, %v704
    %706 = vdwg.mxu0
    %707 = vmatpush.bf16.msra.mxu0 %v630
    %708 = vmatpush.bf16.msra.mxu0 %v628
    %709 = vmatpush.bf16.msra.mxu0 %v626
    %710 = vmatpush.bf16.msra.mxu0 %v624
    %711 = vmatpush.bf16.msra.mxu0 %v622
    %712 = vmatpush.bf16.msra.mxu0 %v620
    %713 = vmatpush.bf16.msra.mxu0 %v618
    %714 = vmatpush.bf16.msra.mxu0 %v616
    %715 = vmatmul.bf16.gmra.mxu0 %v479
    %v716 = vpop.f32.mrf.mxu0
    %v717 = vadd.f32 %v516, %v716
    %v718 = vpop.f32.mrf.mxu0
    %v719 = vadd.f32 %v516, %v718
    %720 = vdwg.mxu0
    %721 = vmatpush.bf16.msra.mxu0 %v646
    %722 = vmatpush.bf16.msra.mxu0 %v644
    %723 = vmatpush.bf16.msra.mxu0 %v642
    %724 = vmatpush.bf16.msra.mxu0 %v640
    %725 = vmatpush.bf16.msra.mxu0 %v638
    %726 = vmatpush.bf16.msra.mxu0 %v636
    %727 = vmatpush.bf16.msra.mxu0 %v634
    %728 = vmatpush.bf16.msra.mxu0 %v632
    %729 = vmatmul.bf16.gmra.mxu0 %v480
    %v730 = vpop.f32.mrf.mxu0
    %v731 = vadd.f32 %v717, %v730
    %v732 = vpop.f32.mrf.mxu0
    %v733 = vadd.f32 %v719, %v732
    %734 = vdwg.mxu0
    %v735 = vmax.f32 %v703, 0.0
    %v736 = vmax.f32 %v731, 0.0
    %v737 = vmax.f32 %v705, 0.0
    %v738 = vmax.f32 %v733, 0.0
    %v739 = vpack.c.bf16 %v737, %v735
    %v740 = vpack.c.bf16 %v738, %v736
    %v741 = vld [vmem:[#allocation11] sm:$0xf]
    %v742 = vld [vmem:[#allocation11 + $0x4] sm:$0xf]
    %v743 = vld [vmem:[#allocation11 + $0x8] sm:$0xf]
    %v744 = vld [vmem:[#allocation11 + $0xc] sm:$0xf]
    %v745 = vld [vmem:[#allocation11 + $0x10] sm:$0xf]
    %v746 = vld [vmem:[#allocation11 + $0x14] sm:$0xf]
    %v747 = vld [vmem:[#allocation11 + $0x18] sm:$0xf]
    %v748 = vld [vmem:[#allocation11 + $0x1c] sm:$0xf]
    %v749 = vld [vmem:[#allocation11 + $0x20] sm:$0xf]
    %v750 = vld [vmem:[#allocation11 + $0x24] sm:$0xf]
    %v751 = vld [vmem:[#allocation11 + $0x28] sm:$0xf]
    %v752 = vld [vmem:[#allocation11 + $0x2c] sm:$0xf]
    %v753 = vld [vmem:[#allocation11 + $0x30] sm:$0xf]
    %v754 = vld [vmem:[#allocation11 + $0x34] sm:$0xf]
    %v755 = vld [vmem:[#allocation11 + $0x38] sm:$0xf]
    %v756 = vld [vmem:[#allocation11 + $0x3c] sm:$0xf]
    %v757 = vld [vmem:[#allocation11 + $0x40] sm:$0xf]
    %v758 = vld [vmem:[#allocation11 + $0x44] sm:$0xf]
    %v759 = vld [vmem:[#allocation11 + $0x48] sm:$0xf]
    %v760 = vld [vmem:[#allocation11 + $0x4c] sm:$0xf]
    %v761 = vld [vmem:[#allocation11 + $0x50] sm:$0xf]
    %v762 = vld [vmem:[#allocation11 + $0x54] sm:$0xf]
    %v763 = vld [vmem:[#allocation11 + $0x58] sm:$0xf]
    %v764 = vld [vmem:[#allocation11 + $0x5c] sm:$0xf]
    %v765 = vld [vmem:[#allocation11 + $0x60] sm:$0xf]
    %v766 = vld [vmem:[#allocation11 + $0x64] sm:$0xf]
    %v767 = vld [vmem:[#allocation11 + $0x68] sm:$0xf]
    %v768 = vld [vmem:[#allocation11 + $0x6c] sm:$0xf]
    %v769 = vld [vmem:[#allocation11 + $0x70] sm:$0xf]
    %v770 = vld [vmem:[#allocation11 + $0x74] sm:$0xf]
    %v771 = vld [vmem:[#allocation11 + $0x78] sm:$0xf]
    %v772 = vld [vmem:[#allocation11 + $0x7c] sm:$0xf]
    %v773 = vld [vmem:[%s8] sm:$0x1]
    %v775 = vperm.slane %v773, 0
    %v809 = vunpack.c.l.b16 %v741
    %v810 = vunpack.c.l.b16 %v742
    %v811 = vunpack.c.l.b16 %v743
    %v812 = vunpack.c.l.b16 %v744
    %v813 = vunpack.c.l.b16 %v745
    %v814 = vunpack.c.l.b16 %v746
    %v815 = vunpack.c.l.b16 %v747
    %v816 = vunpack.c.l.b16 %v748
    %v817 = vunpack.c.l.b16 %v749
    %v818 = vunpack.c.l.b16 %v750
    %v819 = vunpack.c.l.b16 %v751
    %v820 = vunpack.c.l.b16 %v752
    %v821 = vunpack.c.l.b16 %v753
    %v822 = vunpack.c.l.b16 %v754
    %v823 = vunpack.c.l.b16 %v755
    %v824 = vunpack.c.l.b16 %v756
    %v825 = vunpack.c.l.b16 %v757
    %v826 = vunpack.c.l.b16 %v758
    %v827 = vunpack.c.l.b16 %v759
    %v828 = vunpack.c.l.b16 %v760
    %v829 = vunpack.c.l.b16 %v761
    %v830 = vunpack.c.l.b16 %v762
    %v831 = vunpack.c.l.b16 %v763
    %v832 = vunpack.c.l.b16 %v764
    %v833 = vunpack.c.l.b16 %v765
    %v834 = vunpack.c.l.b16 %v766
    %v835 = vunpack.c.l.b16 %v767
    %v836 = vunpack.c.l.b16 %v768
    %v837 = vunpack.c.l.b16 %v769
    %v838 = vunpack.c.l.b16 %v770
    %v839 = vunpack.c.l.b16 %v771
    %v840 = vunpack.c.l.b16 %v772
    %v841 = vpack.c.b16 %v810, %v809
    %v842 = vpack.c.b16 %v812, %v811
    %v843 = vpack.c.b16 %v814, %v813
    %v844 = vpack.c.b16 %v816, %v815
    %v845 = vpack.c.b16 %v818, %v817
    %v846 = vpack.c.b16 %v820, %v819
    %v847 = vpack.c.b16 %v822, %v821
    %v848 = vpack.c.b16 %v824, %v823
    %v849 = vpack.c.b16 %v826, %v825
    %v850 = vpack.c.b16 %v828, %v827
    %v851 = vpack.c.b16 %v830, %v829
    %v852 = vpack.c.b16 %v832, %v831
    %v853 = vpack.c.b16 %v834, %v833
    %v854 = vpack.c.b16 %v836, %v835
    %v855 = vpack.c.b16 %v838, %v837
    %v856 = vpack.c.b16 %v840, %v839
    %873 = vmatpush.bf16.msra.mxu0 %v848
    %874 = vmatpush.bf16.msra.mxu0 %v847
    %875 = vmatpush.bf16.msra.mxu0 %v846
    %876 = vmatpush.bf16.msra.mxu0 %v845
    %877 = vmatpush.bf16.msra.mxu0 %v844
    %878 = vmatpush.bf16.msra.mxu0 %v843
    %879 = vmatpush.bf16.msra.mxu0 %v842
    %880 = vmatpush.bf16.msra.mxu0 %v841
    %881 = vmatmul.bf16.gmra.mxu0 %v739
    %v882 = vpop.f32.mrf.mxu0
    %v883 = vadd.f32 %v775, %v882
    %v884 = vpop.f32.mrf.mxu0
    %v885 = vadd.f32 %v775, %v884
    %886 = vdwg.mxu0
    %887 = vmatpush.bf16.msra.mxu0 %v856
    %888 = vmatpush.bf16.msra.mxu0 %v855
    %889 = vmatpush.bf16.msra.mxu0 %v854
    %890 = vmatpush.bf16.msra.mxu0 %v853
    %891 = vmatpush.bf16.msra.mxu0 %v852
    %892 = vmatpush.bf16.msra.mxu0 %v851
    %893 = vmatpush.bf16.msra.mxu0 %v850
    %894 = vmatpush.bf16.msra.mxu0 %v849
    %895 = vmatmul.bf16.gmra.mxu0 %v740
    %v896 = vpop.f32.mrf.mxu0
    %v897 = vadd.f32 %v883, %v896
    %v898 = vpop.f32.mrf.mxu0
    %v899 = vadd.f32 %v885, %v898
    %900 = vdwg.mxu0
    %901 = vst [vmem:[#allocation13] sm:$0xff] %v897
    %902 = vst [vmem:[#allocation13 + $0x8] sm:$0xff] %v899
    // Predicated region
    $region62: #{tpu_custom_call.1} parent=1 // pred_check
      _
    $region63: #{tpu_custom_call.1} parent=1 // pred_check_branch
      %904 = sbr.rel (0) target = $region65
    $region64: #{tpu_custom_call.1} parent=1 // pred_region
      %906 = vsyncadd [#allocation4], 0
      %s907 = sshll.u32 [#allocation13], 4
      %s908 = int_to_ptr.vmem [resolvable:$true] %s907
      %s909 = sshll.u32 %s9, 4
      %s910 = int_to_ptr.hbm [resolvable:$true] %s909
      %915 = dma.vmem_to_hbm [thread:$0]  %s908, 256, %s910, [#allocation4], 128, 128, 8
    $region65: #{tpu_custom_call.1} parent=1 // pred_fallthru
      _
    // Predicated region
    $region66: #{tpu_custom_call.1} parent=1 // pred_check
      _
    $region67: #{tpu_custom_call.1} parent=1 // pred_check_branch
      %917 = sbr.rel (0) target = $region69
    $region68: #{tpu_custom_call.1} parent=1 // pred_region
      %919 = dma.done [#allocation4], 256
    $region69: #{tpu_custom_call.1} parent=1 // pred_fallthru
      _
    %920 = vsyncpa [#allocation3], 1
    %921 = vsyncpa [#allocation6], 1
    %922 = vsyncpa [#allocation9], 1
    %923 = vsyncpa [#allocation12], 1
    %924 = vsyncpa [#allocation4], 1

</llo_original>
